<compile_context>
chip_gen: v5e
topology: v5e:2x2
jax: 0.10.0
libtpu: 0.0.40
codegen_flags: <defaults>
</compile_context>

<pallas_src>
import jax
import jax.numpy as jnp
from jax.experimental import pallas as pl
from jax.experimental.pallas import tpu as pltpu


def _round_up(x, m):
    return ((x + m - 1) // m) * m


# -----------------------------------------------------------------------------
# Kernels
# -----------------------------------------------------------------------------
def _mlp(obs_ref, w1_ref, b1_ref, w2_ref, b2_ref, w3_ref, b3_ref):
    # Every matmul accumulates in f32; hidden activations are cast back to the
    # weight dtype so bf16 weights keep the MXU on its single-pass bf16 path
    # (for f32 weights the cast is a no-op).
    x = obs_ref[...]
    h1 = jnp.dot(x, w1_ref[...], preferred_element_type=jnp.float32)
    h1 = jnp.maximum(h1 + b1_ref[...], 0.0).astype(w2_ref.dtype)
    h2 = jnp.dot(h1, w2_ref[...], preferred_element_type=jnp.float32)
    h2 = jnp.maximum(h2 + b2_ref[...], 0.0).astype(w3_ref.dtype)
    q = jnp.dot(h2, w3_ref[...], preferred_element_type=jnp.float32)
    return q + b3_ref[...]


def _qnet_kernel(obs_ref, w1_ref, b1_ref, w2_ref, b2_ref, w3_ref, b3_ref,
                 out_ref):
    q = _mlp(obs_ref, w1_ref, b1_ref, w2_ref, b2_ref, w3_ref, b3_ref)
    out_ref[...] = q.astype(out_ref.dtype)


def _qnet_masked_kernel(obs_ref, w1_ref, b1_ref, w2_ref, b2_ref, w3_ref,
                        b3_ref, mask_ref, out_ref):
    q = _mlp(obs_ref, w1_ref, b1_ref, w2_ref, b2_ref, w3_ref, b3_ref)
    q = jnp.where(mask_ref[...] != 0, q, jnp.float32(-jnp.inf))
    out_ref[...] = q.astype(out_ref.dtype)


# -----------------------------------------------------------------------------
# Tiling / VMEM budgeting
# -----------------------------------------------------------------------------
def _vmem_estimate(obs_dim, H1, H2, A, obs_isz, w_isz, has_mask):
    """Lane-padded VMEM bytes: per batch row (double-buffered streams) and for
    the resident weights/biases (budgeted as 2 buffers each)."""
    lane = lambda d: _round_up(d, 128)
    sub = lambda d: _round_up(d, 8)
    per_row = 2 * lane(obs_dim) * obs_isz + 2 * lane(A) * 4   # obs + f32 out
    if has_mask:
        per_row += 2 * lane(A)                                # int8 mask
    w_bytes = 0
    for din, dout in ((obs_dim, H1), (H1, H2), (H2, A)):
        w_bytes += 2 * sub(din) * lane(dout) * w_isz          # weight
        w_bytes += 2 * 8 * lane(dout) * 4                     # f32 bias (1,·)
    return per_row, w_bytes


def _pick_tile(B, cap, granule, min_rows_per_core=256):
    """Choose the batch tile TB.  Returns (TB, needs_pad)."""
    cap = max(granule, (cap // granule) * granule)
    if B <= cap:
        # Whole batch fits in one block.  If it is big enough, split it in two
        # grid steps so dimension_semantics=("parallel",) can shard the batch
        # over v7x's two TensorCores (harmless on single-TC v5e/v6e).
        if B >= 2 * min_rows_per_core and B % (2 * granule) == 0:
            return B // 2, False
        return B, False                     # block == full dim -> no padding
    # Multiple blocks: prefer a granule-multiple divisor of B so we never
    # materialize a padded copy of obs/mask in HBM.
    lo = max(granule, cap // 2)
    for cand in range(cap, lo - granule, -granule):
        if B % cand == 0:
            return cand, False
    return cap, True                         # last resort: pad the batch


# -----------------------------------------------------------------------------
# Wrapper
# -----------------------------------------------------------------------------
def qnetwork_forward(obs, params, action_mask=None, *, block_batch=1024,
                     vmem_budget_bytes=40 << 20, input_buffers=None):
    """Pallas forward pass of QNetwork.

    obs:         (B, obs_dim) float32 or bfloat16
    params:      dict with w1 (obs_dim,H1), b1 (1,H1), w2 (H1,H2), b2 (1,H2),
                 w3 (H2,A), b3 (1,A) -- weights stored (in, out) for x @ W;
                 biases are float32.
    action_mask: optional (B, A); entries equal to 0 mask the action with -inf.
    input_buffers: optional int; if set (!=2), streamed specs use
                 pl.Buffered(n) (use 3 if profiling shows exposed DMA).
    """
    obs = jnp.asarray(obs)
    B, obs_dim = obs.shape
    H1 = params["w1"].shape[1]
    H2 = params["w2"].shape[1]
    A = params["w3"].shape[1]
    has_mask = action_mask is not None
    # int8 mask packs 32 rows per sublane group; f32/bf16 streams need 8.
    granule = 32 if has_mask else 8

    per_row, w_bytes = _vmem_estimate(obs_dim, H1, H2, A,
                                      obs.dtype.itemsize,
                                      params["w1"].dtype.itemsize, has_mask)
    cap = min(block_batch,
              max(granule, (vmem_budget_bytes - w_bytes) // per_row))
    TB, needs_pad = _pick_tile(B, cap, granule)

    B_pad = _round_up(B, TB) if needs_pad else B
    if B_pad != B:
        obs = jnp.pad(obs, ((0, B_pad - B), (0, 0)))
    grid = (B_pad // TB,)

    weights = (params["w1"], params["b1"], params["w2"], params["b2"],
               params["w3"], params["b3"])

    # Streamed (batch-tiled) operands; optionally deeper-buffered.
    spec_kwargs = {}
    if input_buffers is not None and input_buffers != 2:
        spec_kwargs["pipeline_mode"] = pl.Buffered(input_buffers)
    obs_spec = pl.BlockSpec((TB, obs_dim), lambda i: (i, 0), **spec_kwargs)
    out_spec = pl.BlockSpec((TB, A), lambda i: (i, 0), **spec_kwargs)
    # Weights/biases: whole-array blocks, constant index_map -> DMA'd once and
    # VMEM-resident across all grid steps.
    weight_specs = [pl.BlockSpec(w.shape, lambda i: (0, 0)) for w in weights]

    flops = 2 * B_pad * (obs_dim * H1 + H1 * H2 + H2 * A)
    bytes_accessed = (obs.size * obs.dtype.itemsize
                      + sum(w.size * w.dtype.itemsize for w in weights)
                      + B_pad * A * 4)

    if not has_mask:
        # Trace-time specialization: no mask operand, no compare/select.
        kernel = _qnet_kernel
        in_specs = [obs_spec] + weight_specs
        args = (obs,) + weights
    else:
        mask = (jnp.asarray(action_mask) != 0).astype(jnp.int8)
        if B_pad != B:
            mask = jnp.pad(mask, ((0, B_pad - B), (0, 0)))
        mask_spec = pl.BlockSpec((TB, A), lambda i: (i, 0), **spec_kwargs)
        kernel = _qnet_masked_kernel
        in_specs = [obs_spec] + weight_specs + [mask_spec]
        args = (obs,) + weights + (mask,)
        bytes_accessed += mask.size  # int8: 1 byte / element

    # Explicit scoped-VMEM limit from the lane-padded estimate (with margin),
    # capped at v7x's 64 MiB physical VMEM.
    vmem_needed = per_row * TB + w_bytes
    vmem_limit = int(min(64 << 20, max(32 << 20, 2 * vmem_needed)))

    out = pl.pallas_call(
        kernel,
        out_shape=jax.ShapeDtypeStruct((B_pad, A), jnp.float32),
        grid=grid,
        in_specs=in_specs,
        out_specs=out_spec,
        compiler_params=pltpu.CompilerParams(
            dimension_semantics=("parallel",),   # v7x: shard batch over 2 TCs
            vmem_limit_bytes=vmem_limit),
        cost_estimate=pl.CostEstimate(
            flops=flops, transcendentals=0, bytes_accessed=bytes_accessed),
    )(*args)

    if B_pad != B:
        out = out[:B]
    return out


# -----------------------------------------------------------------------------
# Params / reference / checks
# -----------------------------------------------------------------------------
def init_params(key, obs_dim, net_arch, action_dim, dtype=jnp.float32):
    """Init mimicking nn.Linear default (uniform +/- 1/sqrt(fan_in)).

    Weights are produced in (in_dim, out_dim) layout for x @ W.  Biases are
    kept float32 (1, out_dim).  Pass dtype=jnp.bfloat16 for the recommended
    production path (f32 accumulation is kept inside the kernel).
    """
    dims = [obs_dim] + list(net_arch) + [action_dim]
    params = {}
    for i in range(len(dims) - 1):
        fan_in, fan_out = dims[i], dims[i + 1]
        key, kw, kb = jax.random.split(key, 3)
        bound = 1.0 / jnp.sqrt(jnp.float32(fan_in))
        params[f"w{i+1}"] = jax.random.uniform(
            kw, (fan_in, fan_out), jnp.float32, -bound, bound).astype(dtype)
        params[f"b{i+1}"] = jax.random.uniform(
            kb, (1, fan_out), jnp.float32, -bound, bound).astype(jnp.float32)
    return params


def qnetwork_ref(obs, params, action_mask=None):
    """Plain-JAX reference mirroring the kernel math (f32 accumulation,
    activations cast to the weight dtype between layers)."""
    w1, w2, w3 = params["w1"], params["w2"], params["w3"]
    h = jnp.dot(obs, w1, preferred_element_type=jnp.float32) + params["b1"]
    h = jnp.maximum(h, 0.0).astype(w2.dtype)
    h = jnp.dot(h, w2, preferred_element_type=jnp.float32) + params["b2"]
    h = jnp.maximum(h, 0.0).astype(w3.dtype)
    q = jnp.dot(h, w3, preferred_element_type=jnp.float32) + params["b3"]
    if action_mask is not None:
        q = jnp.where(action_mask == 0, -jnp.inf, q)
    return q


def _check(q, ref, atol=1e-5, rtol=1e-5):
    finite = jnp.isfinite(ref)
    assert bool(jnp.all(jnp.isfinite(q) == finite)), "mask (-inf) mismatch"
    assert bool(jnp.allclose(jnp.where(finite, q, 0.0),
                             jnp.where(finite, ref, 0.0),
                             atol=atol, rtol=rtol)), "value mismatch"


if __name__ == "__main__":
    key = jax.random.PRNGKey(0)

    obs_dim = 16          # observation_space.shape[0]
    net_arch = [64, 64]   # default hidden layers
    action_dim = 8        # action_space.n

    key, k_obs, k_mask, k_p, k_obs2, k_obs3 = jax.random.split(key, 6)
    params = init_params(k_p, obs_dim, net_arch, action_dim)

    # ---- small test (batch=2): single full-batch block, masked + unmasked ---
    batch = 2
    obs = jax.random.normal(k_obs, (batch, obs_dim), jnp.float32)
    action_mask = (jax.random.uniform(k_mask, (batch, action_dim)) > 0.5
                   ).astype(jnp.float32)
    action_mask = action_mask.at[:, 0].set(1.0).at[:, 1].set(0.0)

    q_masked = qnetwork_forward(obs, params, action_mask)
    q_plain = qnetwork_forward(obs, params, None)
    jax.block_until_ready((q_masked, q_plain))
    _check(q_masked, qnetwork_ref(obs, params, action_mask))
    _check(q_plain, qnetwork_ref(obs, params, None))

    # ---- multi-block: divisor-tile path (no HBM pad copy) -------------------
    batch2 = 96
    obs2 = jax.random.normal(k_obs2, (batch2, obs_dim), jnp.float32)
    mask2 = (jax.random.uniform(k_mask, (batch2, action_dim)) > 0.3
             ).astype(jnp.float32).at[:, 0].set(1.0)

    q2_masked = qnetwork_forward(obs2, params, mask2, block_batch=48)  # TB=32
    q2_plain = qnetwork_forward(obs2, params, None, block_batch=48)    # TB=48
    jax.block_until_ready((q2_masked, q2_plain))
    _check(q2_masked, qnetwork_ref(obs2, params, mask2))
    _check(q2_plain, qnetwork_ref(obs2, params, None))

    # ---- awkward batch: exercises the padding fallback ----------------------
    batch3 = 48
    obs3 = jax.random.normal(k_obs3, (batch3, obs_dim), jnp.float32)
    mask3 = (jax.random.uniform(k_mask, (batch3, action_dim)) > 0.3
             ).astype(jnp.float32).at[:, 0].set(1.0)
    q3 = qnetwork_forward(obs3, params, mask3, block_batch=32)  # TB=32, pads
    jax.block_until_ready(q3)
    _check(q3, qnetwork_ref(obs3, params, mask3))

    # ---- bf16 production path: bf16 obs + weights, f32 accumulation ---------
    params_bf16 = init_params(k_p, obs_dim, net_arch, action_dim,
                              dtype=jnp.bfloat16)
    obs_bf16 = obs2.astype(jnp.bfloat16)
    q_bf16 = qnetwork_forward(obs_bf16, params_bf16, mask2)
    jax.block_until_ready(q_bf16)
    _check(q_bf16, qnetwork_ref(obs_bf16, params_bf16, mask2),
           atol=1e-2, rtol=1e-2)

    print("KERNEL_OK")
</pallas_src>

<mosaic_0001>
module attributes {stable_mosaic.version = 11 : i64} {
  func.func @_qnet_masked_kernel(%arg0: i32, %arg1: memref<2x16xf32, #tpu.memory_space<vmem>>, %arg2: memref<16x64xf32, #tpu.memory_space<vmem>>, %arg3: memref<1x64xf32, #tpu.memory_space<vmem>>, %arg4: memref<64x64xf32, #tpu.memory_space<vmem>>, %arg5: memref<1x64xf32, #tpu.memory_space<vmem>>, %arg6: memref<64x8xf32, #tpu.memory_space<vmem>>, %arg7: memref<1x8xf32, #tpu.memory_space<vmem>>, %arg8: memref<2x8xi8, #tpu.memory_space<vmem>>, %arg9: memref<2x8xf32, #tpu.memory_space<vmem>>) attributes {dimension_semantics = [#tpu.dimension_semantics<parallel>], iteration_bounds = array<i64: 1>, scalar_prefetch = 0 : i64, scratch_operands = 0 : i64, tpu.core_type = #tpu.core_type<tc>, window_params = [{transform_indices = @transform_0, window_bounds = array<i64: 2, 16>}, {pipeline_mode = #tpu.pipeline_mode<synchronous>, transform_indices = @transform_1, window_bounds = array<i64: 16, 64>}, {pipeline_mode = #tpu.pipeline_mode<synchronous>, transform_indices = @transform_2, window_bounds = array<i64: 1, 64>}, {pipeline_mode = #tpu.pipeline_mode<synchronous>, transform_indices = @transform_3, window_bounds = array<i64: 64, 64>}, {pipeline_mode = #tpu.pipeline_mode<synchronous>, transform_indices = @transform_4, window_bounds = array<i64: 1, 64>}, {pipeline_mode = #tpu.pipeline_mode<synchronous>, transform_indices = @transform_5, window_bounds = array<i64: 64, 8>}, {pipeline_mode = #tpu.pipeline_mode<synchronous>, transform_indices = @transform_6, window_bounds = array<i64: 1, 8>}, {transform_indices = @transform_7, window_bounds = array<i64: 2, 8>}, {transform_indices = @transform_8, window_bounds = array<i64: 2, 8>}]} {
    %c0 = arith.constant 0 : index
    %c0_0 = arith.constant 0 : index
    %0 = vector.load %arg1[%c0, %c0_0] : memref<2x16xf32, #tpu.memory_space<vmem>>, vector<2x16xf32>
    %c0_1 = arith.constant 0 : index
    %c0_2 = arith.constant 0 : index
    %1 = vector.load %arg2[%c0_1, %c0_2] : memref<16x64xf32, #tpu.memory_space<vmem>>, vector<16x64xf32>
    %cst = arith.constant dense<0.000000e+00> : vector<2x64xf32>
    %2 = tpu.matmul %0, %1, %cst {dimension_numbers = #tpu.dot_dimension_numbers<[1], [0], [0], [1], [0, 0, 1, 1], [], []>} : vector<2x16xf32>, vector<16x64xf32>, vector<2x64xf32> -> vector<2x64xf32>
    %c0_3 = arith.constant 0 : index
    %c0_4 = arith.constant 0 : index
    %3 = vector.load %arg3[%c0_3, %c0_4] : memref<1x64xf32, #tpu.memory_space<vmem>>, vector<1x64xf32>
    %4 = vector.broadcast %3 : vector<1x64xf32> to vector<2x64xf32>
    %5 = arith.addf %2, %4 : vector<2x64xf32>
    %cst_5 = arith.constant 0.000000e+00 : f32
    %6 = vector.broadcast %cst_5 : f32 to vector<2x64xf32>
    %7 = arith.maximumf %5, %6 : vector<2x64xf32>
    %c0_6 = arith.constant 0 : index
    %c0_7 = arith.constant 0 : index
    %8 = vector.load %arg4[%c0_6, %c0_7] : memref<64x64xf32, #tpu.memory_space<vmem>>, vector<64x64xf32>
    %cst_8 = arith.constant dense<0.000000e+00> : vector<2x64xf32>
    %9 = tpu.matmul %7, %8, %cst_8 {dimension_numbers = #tpu.dot_dimension_numbers<[1], [0], [0], [1], [0, 0, 1, 1], [], []>} : vector<2x64xf32>, vector<64x64xf32>, vector<2x64xf32> -> vector<2x64xf32>
    %c0_9 = arith.constant 0 : index
    %c0_10 = arith.constant 0 : index
    %10 = vector.load %arg5[%c0_9, %c0_10] : memref<1x64xf32, #tpu.memory_space<vmem>>, vector<1x64xf32>
    %11 = vector.broadcast %10 : vector<1x64xf32> to vector<2x64xf32>
    %12 = arith.addf %9, %11 : vector<2x64xf32>
    %cst_11 = arith.constant 0.000000e+00 : f32
    %13 = vector.broadcast %cst_11 : f32 to vector<2x64xf32>
    %14 = arith.maximumf %12, %13 : vector<2x64xf32>
    %c0_12 = arith.constant 0 : index
    %c0_13 = arith.constant 0 : index
    %15 = vector.load %arg6[%c0_12, %c0_13] : memref<64x8xf32, #tpu.memory_space<vmem>>, vector<64x8xf32>
    %cst_14 = arith.constant dense<0.000000e+00> : vector<2x8xf32>
    %16 = tpu.matmul %14, %15, %cst_14 {dimension_numbers = #tpu.dot_dimension_numbers<[1], [0], [0], [1], [0, 0, 1, 1], [], []>} : vector<2x64xf32>, vector<64x8xf32>, vector<2x8xf32> -> vector<2x8xf32>
    %c0_15 = arith.constant 0 : index
    %c0_16 = arith.constant 0 : index
    %17 = vector.load %arg7[%c0_15, %c0_16] : memref<1x8xf32, #tpu.memory_space<vmem>>, vector<1x8xf32>
    %18 = vector.broadcast %17 : vector<1x8xf32> to vector<2x8xf32>
    %19 = arith.addf %16, %18 : vector<2x8xf32>
    %c0_17 = arith.constant 0 : index
    %c0_18 = arith.constant 0 : index
    %20 = vector.load %arg8[%c0_17, %c0_18] : memref<2x8xi8, #tpu.memory_space<vmem>>, vector<2x8xi8>
    %c0_i8 = arith.constant 0 : i8
    %21 = vector.broadcast %c0_i8 : i8 to vector<2x8xi8>
    %22 = arith.cmpi ne, %20, %21 : vector<2x8xi8>
    %cst_19 = arith.constant 0xFF800000 : f32
    %23 = vector.broadcast %cst_19 : f32 to vector<2x8xf32>
    %24 = arith.select %22, %19, %23 : vector<2x8xi1>, vector<2x8xf32>
    %c0_20 = arith.constant 0 : index
    %c0_21 = arith.constant 0 : index
    %25 = vector.load %arg9[%c0_20, %c0_21] : memref<2x8xf32, #tpu.memory_space<vmem>>, vector<2x8xf32>
    tpu.vector_store %arg9[%c0_20, %c0_21], %24 {strides = array<i32>} : memref<2x8xf32, #tpu.memory_space<vmem>>, vector<2x8xf32>,
    return
  }
  func.func @transform_0(%arg0: i32) -> (i32, i32) {
    %c0_i32 = arith.constant 0 : i32
    %c0_i32_0 = arith.constant 0 : i32
    return %arg0, %c0_i32 : i32, i32
  }
  func.func @transform_1(%arg0: i32) -> (i32, i32) {
    %c0_i32 = arith.constant 0 : i32
    %c0_i32_0 = arith.constant 0 : i32
    %c0_i32_1 = arith.constant 0 : i32
    return %c0_i32, %c0_i32_0 : i32, i32
  }
  func.func @transform_2(%arg0: i32) -> (i32, i32) {
    %c0_i32 = arith.constant 0 : i32
    %c0_i32_0 = arith.constant 0 : i32
    %c0_i32_1 = arith.constant 0 : i32
    return %c0_i32, %c0_i32_0 : i32, i32
  }
  func.func @transform_3(%arg0: i32) -> (i32, i32) {
    %c0_i32 = arith.constant 0 : i32
    %c0_i32_0 = arith.constant 0 : i32
    %c0_i32_1 = arith.constant 0 : i32
    return %c0_i32, %c0_i32_0 : i32, i32
  }
  func.func @transform_4(%arg0: i32) -> (i32, i32) {
    %c0_i32 = arith.constant 0 : i32
    %c0_i32_0 = arith.constant 0 : i32
    %c0_i32_1 = arith.constant 0 : i32
    return %c0_i32, %c0_i32_0 : i32, i32
  }
  func.func @transform_5(%arg0: i32) -> (i32, i32) {
    %c0_i32 = arith.constant 0 : i32
    %c0_i32_0 = arith.constant 0 : i32
    %c0_i32_1 = arith.constant 0 : i32
    return %c0_i32, %c0_i32_0 : i32, i32
  }
  func.func @transform_6(%arg0: i32) -> (i32, i32) {
    %c0_i32 = arith.constant 0 : i32
    %c0_i32_0 = arith.constant 0 : i32
    %c0_i32_1 = arith.constant 0 : i32
    return %c0_i32, %c0_i32_0 : i32, i32
  }
  func.func @transform_7(%arg0: i32) -> (i32, i32) {
    %c0_i32 = arith.constant 0 : i32
    %c0_i32_0 = arith.constant 0 : i32
    return %arg0, %c0_i32 : i32, i32
  }
  func.func @transform_8(%arg0: i32) -> (i32, i32) {
    %c0_i32 = arith.constant 0 : i32
    %c0_i32_0 = arith.constant 0 : i32
    return %arg0, %c0_i32 : i32, i32
  }
}

</mosaic_0001>

<llo_original>
// kernel: tpu_custom_call.1
$region0: #{tpu_custom_call.1}
  #allocation0 [shape = 'u32[]', space=smem, size = 0x4, offset = 0x4, fixed_abs, tag = 'smem constant byte address 0x4 - core index']
  #allocation1 [shape = 'u32[72,128]{1,0:T(1,128)}', space=vmem, size = 0x9000, scoped, tag = 'internal scratch']
  %s0 = inlined_call_operand.vmem [shape: f32[2,16], index: 0, kind: input, shape index: {}]
  %s1 = inlined_call_operand.hbm [shape: f32[16,64], index: 1, kind: input, shape index: {}]
  %s2 = inlined_call_operand.vmem [shape: f32[1,64], index: 2, kind: input, shape index: {}]
  %s3 = inlined_call_operand.vmem [shape: f32[64,64], index: 3, kind: input, shape index: {}]
  %s4 = inlined_call_operand.vmem [shape: f32[1,64], index: 4, kind: input, shape index: {}]
  %s5 = inlined_call_operand.vmem [shape: f32[64,8], index: 5, kind: input, shape index: {}]
  %s6 = inlined_call_operand.vmem [shape: f32[1,8], index: 6, kind: input, shape index: {}]
  %s7 = inlined_call_operand.vmem [shape: s8[2,8], index: 7, kind: input, shape index: {}]
  %s8 = inlined_call_operand.hbm [shape: f32[2,8], index: 8, kind: output, shape index: {}]
  %s9 = sld [smem:[#allocation0]]
  $region46: #{tpu_custom_call.1} parent=0
    _
  %s11 = ssub.s32 1, %s9
  %s12 = scalar_select 0, %s11, %s9
  $region1: #{tpu_custom_call.1} parent=0
    #allocation2 [shape = 'u8[8192]{0}', space=vmem, size = 0x2000, scoped, tag = 'input window, operand 1, single buffered']
    #allocation3 [shape = 's32[1]{0}', space=sflag, size = 0x4, scoped, tag = 'scoped memory for tpu_custom_call.1']
    #allocation4 [shape = 's32[1]{0}', space=sflag, size = 0x4, scoped, tag = 'scoped memory for tpu_custom_call.1']
    #allocation5 [shape = 'u8[1024]{0}', space=vmem, size = 0x400, scoped, tag = 'output window, operand 0, single buffered']
    %13 = vsyncpa [#allocation3], 0
    %14 = vsyncpa [#allocation4], 0
    // Predicated region
    $region2: #{tpu_custom_call.1} parent=1 // pred_check
      _
    $region3: #{tpu_custom_call.1} parent=1 // pred_check_branch
      %16 = sbr.rel (0) target = $region5
    $region4: #{tpu_custom_call.1} parent=1 // pred_region
      _
    $region5: #{tpu_custom_call.1} parent=1 // pred_fallthru
      _
    // Predicated region
    $region6: #{tpu_custom_call.1} parent=1 // pred_check
      _
    $region7: #{tpu_custom_call.1} parent=1 // pred_check_branch
      %18 = sbr.rel (0) target = $region9
    $region8: #{tpu_custom_call.1} parent=1 // pred_region
      %20 = vsyncadd [#allocation3], 0
      %s21 = sshll.u32 %s1, 4
      %s22 = int_to_ptr.hbm [resolvable:$true] %s21
      %s23 = sshll.u32 [#allocation2], 4
      %s24 = int_to_ptr.vmem [resolvable:$true] %s23
      %29 = dma.hbm_to_vmem [thread:$0]  %s22, 256, %s24, [#allocation3], 128, 128, 8
    $region9: #{tpu_custom_call.1} parent=1 // pred_fallthru
      _
    // Predicated region
    $region10: #{tpu_custom_call.1} parent=1 // pred_check
      _
    $region11: #{tpu_custom_call.1} parent=1 // pred_check_branch
      %31 = sbr.rel (0) target = $region13
    $region12: #{tpu_custom_call.1} parent=1 // pred_region
      _
    $region13: #{tpu_custom_call.1} parent=1 // pred_fallthru
      _
    // Predicated region
    $region14: #{tpu_custom_call.1} parent=1 // pred_check
      _
    $region15: #{tpu_custom_call.1} parent=1 // pred_check_branch
      %33 = sbr.rel (0) target = $region17
    $region16: #{tpu_custom_call.1} parent=1 // pred_region
      _
    $region17: #{tpu_custom_call.1} parent=1 // pred_fallthru
      _
    // Predicated region
    $region18: #{tpu_custom_call.1} parent=1 // pred_check
      _
    $region19: #{tpu_custom_call.1} parent=1 // pred_check_branch
      %35 = sbr.rel (0) target = $region21
    $region20: #{tpu_custom_call.1} parent=1 // pred_region
      _
    $region21: #{tpu_custom_call.1} parent=1 // pred_fallthru
      _
    // Predicated region
    $region22: #{tpu_custom_call.1} parent=1 // pred_check
      _
    $region23: #{tpu_custom_call.1} parent=1 // pred_check_branch
      %37 = sbr.rel (0) target = $region25
    $region24: #{tpu_custom_call.1} parent=1 // pred_region
      _
    $region25: #{tpu_custom_call.1} parent=1 // pred_fallthru
      _
    // Predicated region
    $region26: #{tpu_custom_call.1} parent=1 // pred_check
      _
    $region27: #{tpu_custom_call.1} parent=1 // pred_check_branch
      %39 = sbr.rel (0) target = $region29
    $region28: #{tpu_custom_call.1} parent=1 // pred_region
      _
    $region29: #{tpu_custom_call.1} parent=1 // pred_fallthru
      _
    // Predicated region
    $region30: #{tpu_custom_call.1} parent=1 // pred_check
      _
    $region31: #{tpu_custom_call.1} parent=1 // pred_check_branch
      %41 = sbr.rel (0) target = $region33
    $region32: #{tpu_custom_call.1} parent=1 // pred_region
      _
    $region33: #{tpu_custom_call.1} parent=1 // pred_fallthru
      _
    // Predicated region
    $region34: #{tpu_custom_call.1} parent=1 // pred_check
      _
    $region35: #{tpu_custom_call.1} parent=1 // pred_check_branch
      %43 = sbr.rel (0) target = $region37
    $region36: #{tpu_custom_call.1} parent=1 // pred_region
      %45 = dma.done [#allocation3], 256
    $region37: #{tpu_custom_call.1} parent=1 // pred_fallthru
      _
    %v48 = vld [vmem:[%s0] sm:$0x3]
    %v49 = vld [vmem:[#allocation2] sm:$0xff]
    %v50 = vld [vmem:[#allocation2 + $0x8] sm:$0xff]
    %v51 = vld [vmem:[%s2] sm:$0x1]
    %v53 = vperm.slane %v51, 0
    %vm55 = vcmask 130048
    %v57 = vsel %vm55, %v48, 0
    %59 = vmatpush.msra.mxu0 0.0
    %60 = vmatpush.msra.mxu0 0.0
    %61 = vmatpush.msra.mxu0 0.0
    %62 = vmatpush.msra.mxu0 0.0
    %63 = vmatpush.msra.mxu0 0.0
    %64 = vmatpush.msra.mxu0 0.0
    %65 = vmatpush.msra.mxu0 0.0
    %66 = vmatpush.msra.mxu0 0.0
    %67 = vmatpush.msra.mxu0 0.0
    %68 = vmatpush.msra.mxu0 0.0
    %69 = vmatpush.msra.mxu0 0.0
    %70 = vmatpush.msra.mxu0 0.0
    %71 = vmatpush.msra.mxu0 0.0
    %72 = vmatpush.msra.mxu0 0.0
    %73 = vmatpush.msra.mxu0 %v50
    %74 = vmatpush.msra.mxu0 %v49
    %75 = vmatmul.f32.gmra.mxu0 %v57
    %v76 = vpop.f32.mrf.mxu0
    %v77 = vadd.f32 %v53, %v76
    %78 = vdwg.mxu0
    %v79 = vmax.f32 %v77, 0.0
    %v80 = vld [vmem:[%s3] sm:$0xff]
    %v81 = vld [vmem:[%s3 + $0x8] sm:$0xff]
    %v82 = vld [vmem:[%s3 + $0x10] sm:$0xff]
    %v83 = vld [vmem:[%s3 + $0x18] sm:$0xff]
    %v84 = vld [vmem:[%s3 + $0x20] sm:$0xff]
    %v85 = vld [vmem:[%s3 + $0x28] sm:$0xff]
    %v86 = vld [vmem:[%s3 + $0x30] sm:$0xff]
    %v87 = vld [vmem:[%s3 + $0x38] sm:$0xff]
    %v88 = vld [vmem:[%s4] sm:$0x1]
    %v90 = vperm.slane %v88, 0
    %vm92 = vcmask 523264
    %v94 = vsel %vm92, %v79, 0
    %96 = vmatpush.msra.mxu0 0.0
    %97 = vmatpush.msra.mxu0 0.0
    %98 = vmatpush.msra.mxu0 0.0
    %99 = vmatpush.msra.mxu0 0.0
    %100 = vmatpush.msra.mxu0 0.0
    %101 = vmatpush.msra.mxu0 0.0
    %102 = vmatpush.msra.mxu0 0.0
    %103 = vmatpush.msra.mxu0 0.0
    %104 = vmatpush.msra.mxu0 %v87
    %105 = vmatpush.msra.mxu0 %v86
    %106 = vmatpush.msra.mxu0 %v85
    %107 = vmatpush.msra.mxu0 %v84
    %108 = vmatpush.msra.mxu0 %v83
    %109 = vmatpush.msra.mxu0 %v82
    %110 = vmatpush.msra.mxu0 %v81
    %111 = vmatpush.msra.mxu0 %v80
    %112 = vmatmul.f32.gmra.mxu0 %v94
    %v113 = vpop.f32.mrf.mxu0
    %v114 = vadd.f32 %v90, %v113
    %115 = vdwg.mxu0
    %v116 = vmax.f32 %v114, 0.0
    %v117 = vld [vmem:[%s5] sm:$0xff]
    %v118 = vld [vmem:[%s5 + $0x8] sm:$0xff]
    %v119 = vld [vmem:[%s5 + $0x10] sm:$0xff]
    %v120 = vld [vmem:[%s5 + $0x18] sm:$0xff]
    %v121 = vld [vmem:[%s5 + $0x20] sm:$0xff]
    %v122 = vld [vmem:[%s5 + $0x28] sm:$0xff]
    %v123 = vld [vmem:[%s5 + $0x30] sm:$0xff]
    %v124 = vld [vmem:[%s5 + $0x38] sm:$0xff]
    %v125 = vld [vmem:[%s6] sm:$0x1]
    %v127 = vperm.slane %v125, 0
    %v130 = vsel %vm92, %v116, 0
    %132 = vmatpush.msra.mxu0 0.0
    %133 = vmatpush.msra.mxu0 0.0
    %134 = vmatpush.msra.mxu0 0.0
    %135 = vmatpush.msra.mxu0 0.0
    %136 = vmatpush.msra.mxu0 0.0
    %137 = vmatpush.msra.mxu0 0.0
    %138 = vmatpush.msra.mxu0 0.0
    %139 = vmatpush.msra.mxu0 0.0
    %140 = vmatpush.msra.mxu0 %v124
    %141 = vmatpush.msra.mxu0 %v123
    %142 = vmatpush.msra.mxu0 %v122
    %143 = vmatpush.msra.mxu0 %v121
    %144 = vmatpush.msra.mxu0 %v120
    %145 = vmatpush.msra.mxu0 %v119
    %146 = vmatpush.msra.mxu0 %v118
    %147 = vmatpush.msra.mxu0 %v117
    %148 = vmatmul.f32.gmra.mxu0 %v130
    %v149 = vpop.f32.mrf.mxu0
    %v150 = vadd.f32 %v127, %v149
    %151 = vdwg.mxu0
    %v152 = vld [vmem:[%s7] sm:$0x1]
    %vm153 = vnez %v152
    %v154 = vsel %vm153, 16843009, 0
    %v155 = vunpack.c.0.s8 %v154
    %vm156 = vcmp.ne.s32.totalorder %v155, 0
    %v157 = vsel %vm156, %v150, -inf
    %vm158 = vcmask 58368
    %159 = vst.msk [vmem:[#allocation5] sm:$0x3] %vm158, %v157
    // Predicated region
    $region38: #{tpu_custom_call.1} parent=1 // pred_check
      _
    $region39: #{tpu_custom_call.1} parent=1 // pred_check_branch
      %161 = sbr.rel (0) target = $region41
    $region40: #{tpu_custom_call.1} parent=1 // pred_region
      %163 = vsyncadd [#allocation4], 0
      %s165 = sshll.u32 [#allocation5], 4
      %s166 = int_to_ptr.vmem [resolvable:$true] %s165
      %s167 = sshll.u32 %s8, 4
      %s168 = int_to_ptr.hbm [resolvable:$true] %s167
      %170 = dma.vmem_to_hbm [thread:$0]  %s166, 32, %s168, [#allocation4]
    $region41: #{tpu_custom_call.1} parent=1 // pred_fallthru
      _
    // Predicated region
    $region42: #{tpu_custom_call.1} parent=1 // pred_check
      _
    $region43: #{tpu_custom_call.1} parent=1 // pred_check_branch
      %172 = sbr.rel (0) target = $region45
    $region44: #{tpu_custom_call.1} parent=1 // pred_region
      %174 = dma.done [#allocation4], 32
    $region45: #{tpu_custom_call.1} parent=1 // pred_fallthru
      _
    %175 = vsyncpa [#allocation3], 1
    %176 = vsyncpa [#allocation4], 1

</llo_original>
